<compile_context>
chip_gen: v7x
topology: tpu7x:2x2x1
jax: 0.10.0
libtpu: 0.0.40
codegen_flags: <defaults>
</compile_context>

<pallas_src>
import functools

import jax
import jax.numpy as jnp
from jax.experimental import pallas as pl
from jax.experimental.pallas import tpu as pltpu


def _round_up(a, b):
    return (a + b - 1) // b * b


def _masked_linear_kernel_single(x_ref, wt_ref, ind_ref, outd_ref, b_ref, o_ref,
                                 *, precision):
    # Whole K reduction fits in one tile: no accumulator, no k axis bookkeeping.
    # Mask built in-register from the degree vectors (VPU compare + select).
    mask = outd_ref[...] >= ind_ref[...]                      # (tk, tn) bool
    w = jnp.where(mask, wt_ref[...], 0).astype(wt_ref.dtype)  # masked weight tile
    acc = jnp.dot(x_ref[...], w,
                  preferred_element_type=jnp.float32, precision=precision)
    o_ref[...] = (acc + b_ref[...]).astype(o_ref.dtype)


def _masked_linear_kernel_reduce(x_ref, wt_ref, ind_ref, outd_ref, b_ref, o_ref,
                                 acc_ref, *, precision):
    k = pl.program_id(2)

    @pl.when(k == 0)
    def _init():
        acc_ref[...] = jnp.zeros_like(acc_ref)

    # Triangular-mask tile skip: if every output degree in this j tile is below
    # every input degree in this k tile, the masked weight tile is all zeros.
    tile_live = jnp.max(outd_ref[...]) >= jnp.min(ind_ref[...])

    @pl.when(tile_live)
    def _compute():
        mask = outd_ref[...] >= ind_ref[...]                      # (tk, tn) bool
        w = jnp.where(mask, wt_ref[...], 0).astype(wt_ref.dtype)
        acc_ref[...] += jnp.dot(x_ref[...], w,
                                preferred_element_type=jnp.float32,
                                precision=precision)

    @pl.when(k == pl.num_programs(2) - 1)
    def _finalize():
        o_ref[...] = (acc_ref[...] + b_ref[...]).astype(o_ref.dtype)


def masked_linear_forward(inputs, weight, bias, input_degrees, output_degrees,
                          *, tm=256, tn=512, tk=512,
                          compute_dtype=None, precision=None):
    """Pallas equivalent of MaskedLinear.forward.

    inputs:          (..., K)
    weight:          (N, K)   (torch nn.Linear layout)
    bias:            (N,)
    input_degrees:   (K,)
    output_degrees:  (N,)
    returns:         (..., N), dtype of `inputs`.
    """
    N, K = weight.shape
    lead = inputs.shape[:-1]
    out_dtype = inputs.dtype
    cdt = jnp.dtype(compute_dtype) if compute_dtype is not None else jnp.dtype(out_dtype)
    itemsize = cdt.itemsize

    x2 = inputs.reshape(-1, K).astype(cdt)
    M = x2.shape[0]

    # Pad to TPU-friendly tile multiples (sublane=8, lane=128).  Zero padding
    # is semantically safe: padded K rows contribute 0, padded N cols sliced off.
    Mp = _round_up(max(M, 8), 8)
    Kp = _round_up(K, 128)
    Np = _round_up(N, 128)
    tm = min(_round_up(tm, 8), Mp)
    tn = min(_round_up(tn, 128), Np)
    tk = min(_round_up(tk, 128), Kp)
    Mp = _round_up(Mp, tm)
    Kp = _round_up(Kp, tk)
    Np = _round_up(Np, tn)
    gm, gn, gk = Mp // tm, Np // tn, Kp // tk

    xp = jnp.pad(x2, ((0, Mp - M), (0, Kp - K)))
    wt = jnp.pad(weight.astype(cdt).T, ((0, Kp - K), (0, Np - N)))         # (Kp, Np)
    bp = jnp.pad(bias.astype(jnp.float32), (0, Np - N)).reshape(1, Np)     # (1, Np)

    # Degree vectors: input degrees padded with a huge value, output degrees
    # with a very negative one, so padded rows/cols are masked out and the
    # per-tile min/max skip test stays correct.
    big = 2 ** 30
    ind = jnp.pad(input_degrees.astype(jnp.int32), (0, Kp - K),
                  constant_values=big).reshape(Kp, 1)                      # (Kp, 1)
    outd = jnp.pad(output_degrees.astype(jnp.int32), (0, Np - N),
                   constant_values=-big).reshape(1, Np)                    # (1, Np)

    in_specs = [
        pl.BlockSpec((tm, tk), lambda i, j, k: (i, k)),   # x
        pl.BlockSpec((tk, tn), lambda i, j, k: (k, j)),   # W^T
        pl.BlockSpec((tk, 1), lambda i, j, k: (k, 0)),    # input degrees (column)
        pl.BlockSpec((1, tn), lambda i, j, k: (0, j)),    # output degrees (row)
        pl.BlockSpec((1, tn), lambda i, j, k: (0, j)),    # bias
    ]
    out_spec = pl.BlockSpec((tm, tn), lambda i, j, k: (i, j))

    if gk == 1:
        kernel = functools.partial(_masked_linear_kernel_single, precision=precision)
        scratch = []
    else:
        kernel = functools.partial(_masked_linear_kernel_reduce, precision=precision)
        scratch = [pltpu.VMEM((tm, tn), jnp.float32)]

    # Real streaming pattern: W^T streamed once per i block, x once per j block.
    out_itemsize = jnp.dtype(out_dtype).itemsize
    cost = pl.CostEstimate(
        flops=2 * Mp * Np * Kp + gm * Kp * Np,             # matmul + per-i mask select
        transcendentals=0,
        bytes_accessed=(xp.size * itemsize * gn
                        + wt.size * itemsize * gm
                        + (bp.size + ind.size + outd.size) * 4 * gm
                        + Mp * Np * out_itemsize),
    )

    # Per-step VMEM footprint (double-buffered x/W/out + f32 acc + masked-W temp).
    vmem_need = (2 * tm * tk * itemsize + 2 * tk * tn * itemsize
                 + 2 * tm * tn * out_itemsize + tm * tn * 4 + tk * tn * itemsize
                 + 4 * (tk + 2 * tn) * 4)
    vmem_limit = min(max(32 * 1024 * 1024, int(1.5 * vmem_need)), 64 * 1024 * 1024)

    out = pl.pallas_call(
        kernel,
        out_shape=jax.ShapeDtypeStruct((Mp, Np), out_dtype),
        grid_spec=pltpu.PrefetchScalarGridSpec(
            num_scalar_prefetch=0,
            grid=(gm, gn, gk),
            in_specs=in_specs,
            out_specs=out_spec,
            scratch_shapes=scratch,
        ),
        compiler_params=pltpu.CompilerParams(
            dimension_semantics=("parallel", "parallel", "arbitrary"),
            vmem_limit_bytes=vmem_limit,
        ),
        cost_estimate=cost,
    )(xp, wt, ind, outd, bp)

    return out[:M, :N].reshape(*lead, N)


def _reference(x, weight, bias, input_degrees, output_degrees):
    mask = (output_degrees[:, None] >= input_degrees[None, :]).astype(weight.dtype)
    return x @ (mask * weight).T + bias


if __name__ == "__main__":
    key = jax.random.PRNGKey(0)

    # --- Test 1: small MADE layer (single-tile fast path), K = N = 32, batch=2.
    k_w, k_b, k_x, key = (*jax.random.split(key, 3), key)
    K = N = 32
    in_deg = jnp.arange(1, K + 1, dtype=jnp.int32)
    out_deg = jnp.arange(1, N + 1, dtype=jnp.int32)
    weight = jax.random.normal(k_w, (N, K), dtype=jnp.float32) / jnp.sqrt(K)
    bias = jax.random.normal(k_b, (N,), dtype=jnp.float32) * 0.1
    x = jax.random.normal(k_x, (2, K), dtype=jnp.float32)

    out = masked_linear_forward(x, weight, bias, in_deg, out_deg)
    out = jax.block_until_ready(out)
    ref = _reference(x, weight, bias, in_deg, out_deg)
    assert out.shape == (2, N) and out.dtype == x.dtype
    # Default MXU precision rounds f32 operands to bf16 -> loosened tolerance.
    assert jnp.allclose(out, ref, atol=5e-2, rtol=5e-2), (
        f"max abs err {jnp.max(jnp.abs(out - ref))}")

    # --- Test 2: force the multi-tile reduction path (+ triangular tile skip).
    k_w2, k_b2, k_x2, _ = jax.random.split(key, 4)
    K2 = N2 = 256
    in_deg2 = jnp.arange(1, K2 + 1, dtype=jnp.int32)
    out_deg2 = jnp.arange(1, N2 + 1, dtype=jnp.int32)
    weight2 = jax.random.normal(k_w2, (N2, K2), dtype=jnp.float32) / jnp.sqrt(K2)
    bias2 = jax.random.normal(k_b2, (N2,), dtype=jnp.float32) * 0.1
    x2 = jax.random.normal(k_x2, (16, K2), dtype=jnp.float32)

    out2 = masked_linear_forward(x2, weight2, bias2, in_deg2, out_deg2,
                                 tm=128, tn=128, tk=128)
    out2 = jax.block_until_ready(out2)
    ref2 = _reference(x2, weight2, bias2, in_deg2, out_deg2)
    assert out2.shape == (16, N2) and out2.dtype == x2.dtype
    assert jnp.allclose(out2, ref2, atol=5e-2, rtol=5e-2), (
        f"max abs err {jnp.max(jnp.abs(out2 - ref2))}")

    print("KERNEL_OK")
</pallas_src>

<mosaic_0001>
module attributes {stable_mosaic.version = 11 : i64} {
  func.func @_masked_linear_kernel_single(%arg0: i32, %arg1: i32, %arg2: i32, %arg3: memref<8x128xf32, #tpu.memory_space<vmem>>, %arg4: memref<128x128xf32, #tpu.memory_space<vmem>>, %arg5: memref<128x1xi32, #tpu.memory_space<vmem>>, %arg6: memref<1x128xi32, #tpu.memory_space<vmem>>, %arg7: memref<1x128xf32, #tpu.memory_space<vmem>>, %arg8: memref<8x128xf32, #tpu.memory_space<vmem>>) attributes {dimension_semantics = [#tpu.dimension_semantics<parallel>, #tpu.dimension_semantics<parallel>, #tpu.dimension_semantics<arbitrary>], iteration_bounds = array<i64: 1, 1, 1>, scalar_prefetch = 0 : i64, scratch_operands = 0 : i64, tpu.core_type = #tpu.core_type<tc>, window_params = [{transform_indices = @transform_0, window_bounds = array<i64: 8, 128>}, {transform_indices = @transform_1, window_bounds = array<i64: 128, 128>}, {transform_indices = @transform_2, window_bounds = array<i64: 128, 1>}, {transform_indices = @transform_3, window_bounds = array<i64: 1, 128>}, {transform_indices = @transform_4, window_bounds = array<i64: 1, 128>}, {transform_indices = @transform_5, window_bounds = array<i64: 8, 128>}]} {
    %c0 = arith.constant 0 : index
    %c0_0 = arith.constant 0 : index
    %0 = vector.load %arg6[%c0, %c0_0] : memref<1x128xi32, #tpu.memory_space<vmem>>, vector<1x128xi32>
    %c0_1 = arith.constant 0 : index
    %c0_2 = arith.constant 0 : index
    %1 = vector.load %arg5[%c0_1, %c0_2] : memref<128x1xi32, #tpu.memory_space<vmem>>, vector<128x1xi32>
    %2 = vector.broadcast %0 : vector<1x128xi32> to vector<128x128xi32>
    %3 = vector.broadcast %1 : vector<128x1xi32> to vector<128x128xi32>
    %4 = arith.cmpi sge, %2, %3 : vector<128x128xi32>
    %c0_3 = arith.constant 0 : index
    %c0_4 = arith.constant 0 : index
    %5 = vector.load %arg4[%c0_3, %c0_4] : memref<128x128xf32, #tpu.memory_space<vmem>>, vector<128x128xf32>
    %c0_i32 = arith.constant 0 : i32
    %6 = arith.sitofp %c0_i32 : i32 to f32
    %7 = vector.broadcast %6 : f32 to vector<128x128xf32>
    %8 = arith.select %4, %5, %7 : vector<128x128xi1>, vector<128x128xf32>
    %c0_5 = arith.constant 0 : index
    %c0_6 = arith.constant 0 : index
    %9 = vector.load %arg3[%c0_5, %c0_6] : memref<8x128xf32, #tpu.memory_space<vmem>>, vector<8x128xf32>
    %cst = arith.constant dense<0.000000e+00> : vector<8x128xf32>
    %10 = tpu.matmul %9, %8, %cst {dimension_numbers = #tpu.dot_dimension_numbers<[1], [0], [0], [1], [0, 0, 1, 1], [], []>} : vector<8x128xf32>, vector<128x128xf32>, vector<8x128xf32> -> vector<8x128xf32>
    %c0_7 = arith.constant 0 : index
    %c0_8 = arith.constant 0 : index
    %11 = vector.load %arg7[%c0_7, %c0_8] : memref<1x128xf32, #tpu.memory_space<vmem>>, vector<1x128xf32>
    %12 = vector.broadcast %11 : vector<1x128xf32> to vector<8x128xf32>
    %13 = arith.addf %10, %12 : vector<8x128xf32>
    %c0_9 = arith.constant 0 : index
    %c0_10 = arith.constant 0 : index
    %14 = vector.load %arg8[%c0_9, %c0_10] : memref<8x128xf32, #tpu.memory_space<vmem>>, vector<8x128xf32>
    tpu.vector_store %arg8[%c0_9, %c0_10], %13 {strides = array<i32>} : memref<8x128xf32, #tpu.memory_space<vmem>>, vector<8x128xf32>,
    return
  }
  func.func @transform_0(%arg0: i32, %arg1: i32, %arg2: i32) -> (i32, i32) {
    %c0_i32 = arith.constant 0 : i32
    return %arg0, %arg2 : i32, i32
  }
  func.func @transform_1(%arg0: i32, %arg1: i32, %arg2: i32) -> (i32, i32) {
    %c0_i32 = arith.constant 0 : i32
    return %arg2, %arg1 : i32, i32
  }
  func.func @transform_2(%arg0: i32, %arg1: i32, %arg2: i32) -> (i32, i32) {
    %c0_i32 = arith.constant 0 : i32
    %c0_i32_0 = arith.constant 0 : i32
    return %arg2, %c0_i32 : i32, i32
  }
  func.func @transform_3(%arg0: i32, %arg1: i32, %arg2: i32) -> (i32, i32) {
    %c0_i32 = arith.constant 0 : i32
    %c0_i32_0 = arith.constant 0 : i32
    return %c0_i32, %arg1 : i32, i32
  }
  func.func @transform_4(%arg0: i32, %arg1: i32, %arg2: i32) -> (i32, i32) {
    %c0_i32 = arith.constant 0 : i32
    %c0_i32_0 = arith.constant 0 : i32
    return %c0_i32, %arg1 : i32, i32
  }
  func.func @transform_5(%arg0: i32, %arg1: i32, %arg2: i32) -> (i32, i32) {
    %c0_i32 = arith.constant 0 : i32
    return %arg0, %arg1 : i32, i32
  }
}

</mosaic_0001>

<llo_original>
// kernel: tpu_custom_call.1
$region0: #{tpu_custom_call.1}
  #allocation0 [shape = 'u32[]', space=smem, size = 0x4, offset = 0x4, fixed_abs, tag = 'smem constant byte address 0x4 - core index']
  #allocation1 [shape = 'u32[144,128]{1,0:T(1,128)}', space=vmem, size = 0x12000, scoped, tag = 'internal scratch']
  %s0 = inlined_call_operand.hbm [shape: f32[8,128], index: 0, kind: input, shape index: {}]
  %s1 = inlined_call_operand.vmem [shape: f32[128,128], index: 1, kind: input, shape index: {}]
  %s2 = inlined_call_operand.vmem [shape: s32[128,1], index: 2, kind: input, shape index: {}]
  %s3 = inlined_call_operand.vmem [shape: s32[1,128], index: 3, kind: input, shape index: {}]
  %s4 = inlined_call_operand.vmem [shape: f32[1,128], index: 4, kind: input, shape index: {}]
  %s5 = inlined_call_operand.hbm [shape: f32[8,128], index: 5, kind: output, shape index: {}]
  %s6 = sld [smem:[#allocation0]]
  $region34: #{tpu_custom_call.1} parent=0
    _
  %s8 = ssub.s32 1, %s6
  %s9 = scalar_select 0, %s8, %s6
  $region1: #{tpu_custom_call.1} parent=0
    #allocation2 [shape = 'u8[4096]{0}', space=vmem, size = 0x1000, scoped, tag = 'input window, operand 0, single buffered']
    #allocation3 [shape = 's32[1]{0}', space=sflag, size = 0x4, scoped, tag = 'scoped memory for tpu_custom_call.1']
    #allocation4 [shape = 's32[1]{0}', space=sflag, size = 0x4, scoped, tag = 'scoped memory for tpu_custom_call.1']
    #allocation5 [shape = 'u8[4096]{0}', space=vmem, size = 0x1000, scoped, tag = 'output window, operand 0, single buffered']
    %10 = vsyncpa [#allocation3], 0
    %11 = vsyncpa [#allocation4], 0
    // Predicated region
    $region2: #{tpu_custom_call.1} parent=1 // pred_check
      _
    $region3: #{tpu_custom_call.1} parent=1 // pred_check_branch
      %13 = sbr.rel (0) target = $region5
    $region4: #{tpu_custom_call.1} parent=1 // pred_region
      %s15 = ssub.s32 128, 128
      %16 = vsyncadd [#allocation3], %s15
      %s18 = sshll.u32 [#allocation2], 4
      %s19 = int_to_ptr.vmem [resolvable:$true] %s18
      %21 = dma.hbm_to_vmem [thread:$0]  %s0, 128, %s19, [#allocation3]
    $region5: #{tpu_custom_call.1} parent=1 // pred_fallthru
      _
    // Predicated region
    $region6: #{tpu_custom_call.1} parent=1 // pred_check
      _
    $region7: #{tpu_custom_call.1} parent=1 // pred_check_branch
      %23 = sbr.rel (0) target = $region9
    $region8: #{tpu_custom_call.1} parent=1 // pred_region
      _
    $region9: #{tpu_custom_call.1} parent=1 // pred_fallthru
      _
    // Predicated region
    $region10: #{tpu_custom_call.1} parent=1 // pred_check
      _
    $region11: #{tpu_custom_call.1} parent=1 // pred_check_branch
      %25 = sbr.rel (0) target = $region13
    $region12: #{tpu_custom_call.1} parent=1 // pred_region
      _
    $region13: #{tpu_custom_call.1} parent=1 // pred_fallthru
      _
    // Predicated region
    $region14: #{tpu_custom_call.1} parent=1 // pred_check
      _
    $region15: #{tpu_custom_call.1} parent=1 // pred_check_branch
      %27 = sbr.rel (0) target = $region17
    $region16: #{tpu_custom_call.1} parent=1 // pred_region
      _
    $region17: #{tpu_custom_call.1} parent=1 // pred_fallthru
      _
    // Predicated region
    $region18: #{tpu_custom_call.1} parent=1 // pred_check
      _
    $region19: #{tpu_custom_call.1} parent=1 // pred_check_branch
      %29 = sbr.rel (0) target = $region21
    $region20: #{tpu_custom_call.1} parent=1 // pred_region
      _
    $region21: #{tpu_custom_call.1} parent=1 // pred_fallthru
      _
    // Predicated region
    $region22: #{tpu_custom_call.1} parent=1 // pred_check
      _
    $region23: #{tpu_custom_call.1} parent=1 // pred_check_branch
      %31 = sbr.rel (0) target = $region25
    $region24: #{tpu_custom_call.1} parent=1 // pred_region
      %32 = dma.done [#allocation3], 128
    $region25: #{tpu_custom_call.1} parent=1 // pred_fallthru
      _
    %v33 = vld [vmem:[%s3] sm:$0x1]
    %v34 = vld [vmem:[%s2] sm:$0xff]
    %v35 = vld [vmem:[%s2 + $0x8] sm:$0xff]
    %v36 = vld [vmem:[%s2 + $0x10] sm:$0xff]
    %v37 = vld [vmem:[%s2 + $0x18] sm:$0xff]
    %v38 = vld [vmem:[%s2 + $0x20] sm:$0xff]
    %v39 = vld [vmem:[%s2 + $0x28] sm:$0xff]
    %v40 = vld [vmem:[%s2 + $0x30] sm:$0xff]
    %v41 = vld [vmem:[%s2 + $0x38] sm:$0xff]
    %v42 = vld [vmem:[%s2 + $0x40] sm:$0xff]
    %v43 = vld [vmem:[%s2 + $0x48] sm:$0xff]
    %v44 = vld [vmem:[%s2 + $0x50] sm:$0xff]
    %v45 = vld [vmem:[%s2 + $0x58] sm:$0xff]
    %v46 = vld [vmem:[%s2 + $0x60] sm:$0xff]
    %v47 = vld [vmem:[%s2 + $0x68] sm:$0xff]
    %v48 = vld [vmem:[%s2 + $0x70] sm:$0xff]
    %v49 = vld [vmem:[%s2 + $0x78] sm:$0xff]
    %v50 = vlaneseq
    %v51 = vshrl.u32 %v50, 7
    %v52 = vsub.s32 0, %v51
    %v53 = vrot.slane %v33, %v52
    %54 = vset.pattern.permute.xlu0 0
    %55 = vperm.xlu0 %54, %v34
    %v56 = vpop.permute.xlu0 %55
    %57 = vset.pattern.permute.xlu0 0
    %58 = vperm.xlu0 %57, %v35
    %v59 = vpop.permute.xlu0 %58
    %60 = vset.pattern.permute.xlu0 0
    %61 = vperm.xlu0 %60, %v36
    %v62 = vpop.permute.xlu0 %61
    %63 = vset.pattern.permute.xlu0 0
    %64 = vperm.xlu0 %63, %v37
    %v65 = vpop.permute.xlu0 %64
    %66 = vset.pattern.permute.xlu0 0
    %67 = vperm.xlu0 %66, %v38
    %v68 = vpop.permute.xlu0 %67
    %69 = vset.pattern.permute.xlu0 0
    %70 = vperm.xlu0 %69, %v39
    %v71 = vpop.permute.xlu0 %70
    %72 = vset.pattern.permute.xlu0 0
    %73 = vperm.xlu0 %72, %v40
    %v74 = vpop.permute.xlu0 %73
    %75 = vset.pattern.permute.xlu0 0
    %76 = vperm.xlu0 %75, %v41
    %v77 = vpop.permute.xlu0 %76
    %78 = vset.pattern.permute.xlu0 0
    %79 = vperm.xlu0 %78, %v42
    %v80 = vpop.permute.xlu0 %79
    %81 = vset.pattern.permute.xlu0 0
    %82 = vperm.xlu0 %81, %v43
    %v83 = vpop.permute.xlu0 %82
    %84 = vset.pattern.permute.xlu0 0
    %85 = vperm.xlu0 %84, %v44
    %v86 = vpop.permute.xlu0 %85
    %87 = vset.pattern.permute.xlu0 0
    %88 = vperm.xlu0 %87, %v45
    %v89 = vpop.permute.xlu0 %88
    %90 = vset.pattern.permute.xlu0 0
    %91 = vperm.xlu0 %90, %v46
    %v92 = vpop.permute.xlu0 %91
    %93 = vset.pattern.permute.xlu0 0
    %94 = vperm.xlu0 %93, %v47
    %v95 = vpop.permute.xlu0 %94
    %96 = vset.pattern.permute.xlu0 0
    %97 = vperm.xlu0 %96, %v48
    %v98 = vpop.permute.xlu0 %97
    %99 = vset.pattern.permute.xlu0 0
    %100 = vperm.xlu0 %99, %v49
    %v101 = vpop.permute.xlu0 %100
    %vm102 = vcmp.ge.s32.totalorder %v53, %v56
    %vm103 = vcmp.ge.s32.totalorder %v53, %v59
    %vm104 = vcmp.ge.s32.totalorder %v53, %v62
    %vm105 = vcmp.ge.s32.totalorder %v53, %v65
    %vm106 = vcmp.ge.s32.totalorder %v53, %v68
    %vm107 = vcmp.ge.s32.totalorder %v53, %v71
    %vm108 = vcmp.ge.s32.totalorder %v53, %v74
    %vm109 = vcmp.ge.s32.totalorder %v53, %v77
    %vm110 = vcmp.ge.s32.totalorder %v53, %v80
    %vm111 = vcmp.ge.s32.totalorder %v53, %v83
    %vm112 = vcmp.ge.s32.totalorder %v53, %v86
    %vm113 = vcmp.ge.s32.totalorder %v53, %v89
    %vm114 = vcmp.ge.s32.totalorder %v53, %v92
    %vm115 = vcmp.ge.s32.totalorder %v53, %v95
    %vm116 = vcmp.ge.s32.totalorder %v53, %v98
    %vm117 = vcmp.ge.s32.totalorder %v53, %v101
    %v118 = vld [vmem:[%s1] sm:$0xff]
    %v119 = vld [vmem:[%s1 + $0x8] sm:$0xff]
    %v120 = vld [vmem:[%s1 + $0x10] sm:$0xff]
    %v121 = vld [vmem:[%s1 + $0x18] sm:$0xff]
    %v122 = vld [vmem:[%s1 + $0x20] sm:$0xff]
    %v123 = vld [vmem:[%s1 + $0x28] sm:$0xff]
    %v124 = vld [vmem:[%s1 + $0x30] sm:$0xff]
    %v125 = vld [vmem:[%s1 + $0x38] sm:$0xff]
    %v126 = vld [vmem:[%s1 + $0x40] sm:$0xff]
    %v127 = vld [vmem:[%s1 + $0x48] sm:$0xff]
    %v128 = vld [vmem:[%s1 + $0x50] sm:$0xff]
    %v129 = vld [vmem:[%s1 + $0x58] sm:$0xff]
    %v130 = vld [vmem:[%s1 + $0x60] sm:$0xff]
    %v131 = vld [vmem:[%s1 + $0x68] sm:$0xff]
    %v132 = vld [vmem:[%s1 + $0x70] sm:$0xff]
    %v133 = vld [vmem:[%s1 + $0x78] sm:$0xff]
    %v134 = vsel %vm102, %v118, 0.0
    %v135 = vsel %vm103, %v119, 0.0
    %v136 = vsel %vm104, %v120, 0.0
    %v137 = vsel %vm105, %v121, 0.0
    %v138 = vsel %vm106, %v122, 0.0
    %v139 = vsel %vm107, %v123, 0.0
    %v140 = vsel %vm108, %v124, 0.0
    %v141 = vsel %vm109, %v125, 0.0
    %v142 = vsel %vm110, %v126, 0.0
    %v143 = vsel %vm111, %v127, 0.0
    %v144 = vsel %vm112, %v128, 0.0
    %v145 = vsel %vm113, %v129, 0.0
    %v146 = vsel %vm114, %v130, 0.0
    %v147 = vsel %vm115, %v131, 0.0
    %v148 = vsel %vm116, %v132, 0.0
    %v149 = vsel %vm117, %v133, 0.0
    %v150 = vld [vmem:[#allocation2] sm:$0xff]
    %v151 = vld [vmem:[%s4] sm:$0x1]
    %v153 = vlaneseq
    %v154 = vshrl.u32 %v153, 7
    %v155 = vsub.s32 0, %v154
    %v156 = vrot.slane %v151, %v155
    %158 = vmatprep.subr.mxu0 0.0
    %159 = vmatpush1.msra.mxu0 %v134
    %160 = vmatprep.subr.mxu0 0.0
    %161 = vmatpush1.msra.mxu0 %v135
    %162 = vmatprep.subr.mxu0 0.0
    %163 = vmatpush1.msra.mxu0 %v136
    %164 = vmatprep.subr.mxu0 0.0
    %165 = vmatpush1.msra.mxu0 %v137
    %166 = vmatprep.subr.mxu0 0.0
    %167 = vmatpush1.msra.mxu0 %v138
    %168 = vmatprep.subr.mxu0 0.0
    %169 = vmatpush1.msra.mxu0 %v139
    %170 = vmatprep.subr.mxu0 0.0
    %171 = vmatpush1.msra.mxu0 %v140
    %172 = vmatprep.subr.mxu0 0.0
    %173 = vmatpush1.msra.mxu0 %v141
    %174 = vmatprep.subr.mxu0 0.0
    %175 = vmatpush1.msra.mxu0 %v142
    %176 = vmatprep.subr.mxu0 0.0
    %177 = vmatpush1.msra.mxu0 %v143
    %178 = vmatprep.subr.mxu0 0.0
    %179 = vmatpush1.msra.mxu0 %v144
    %180 = vmatprep.subr.mxu0 0.0
    %181 = vmatpush1.msra.mxu0 %v145
    %182 = vmatprep.subr.mxu0 0.0
    %183 = vmatpush1.msra.mxu0 %v146
    %184 = vmatprep.subr.mxu0 0.0
    %185 = vmatpush1.msra.mxu0 %v147
    %186 = vmatprep.subr.mxu0 0.0
    %187 = vmatpush1.msra.mxu0 %v148
    %188 = vmatprep.subr.mxu0 0.0
    %189 = vmatpush1.msra.mxu0 %v149
    %190 = vmatprep.subr.mxu0 0.0
    %191 = vmatpush1.msra.mxu0 0.0
    %192 = vmatprep.subr.mxu0 0.0
    %193 = vmatpush1.msra.mxu0 0.0
    %194 = vmatprep.subr.mxu0 0.0
    %195 = vmatpush1.msra.mxu0 0.0
    %196 = vmatprep.subr.mxu0 0.0
    %197 = vmatpush1.msra.mxu0 0.0
    %198 = vmatprep.subr.mxu0 0.0
    %199 = vmatpush1.msra.mxu0 0.0
    %200 = vmatprep.subr.mxu0 0.0
    %201 = vmatpush1.msra.mxu0 0.0
    %202 = vmatprep.subr.mxu0 0.0
    %203 = vmatpush1.msra.mxu0 0.0
    %204 = vmatprep.subr.mxu0 0.0
    %205 = vmatpush1.msra.mxu0 0.0
    %206 = vmatprep.subr.mxu0 0.0
    %207 = vmatpush1.msra.mxu0 0.0
    %208 = vmatprep.subr.mxu0 0.0
    %209 = vmatpush1.msra.mxu0 0.0
    %210 = vmatprep.subr.mxu0 0.0
    %211 = vmatpush1.msra.mxu0 0.0
    %212 = vmatprep.subr.mxu0 0.0
    %213 = vmatpush1.msra.mxu0 0.0
    %214 = vmatprep.subr.mxu0 0.0
    %215 = vmatpush1.msra.mxu0 0.0
    %216 = vmatprep.subr.mxu0 0.0
    %217 = vmatpush1.msra.mxu0 0.0
    %218 = vmatprep.subr.mxu0 0.0
    %219 = vmatpush1.msra.mxu0 0.0
    %220 = vmatprep.subr.mxu0 0.0
    %221 = vmatpush1.msra.mxu0 0.0
    %222 = vmatprep.mubr.f32.mxu0 0.0
    %223 = vmatmul.mubr.f32.gmra.mrb[0].mxu0 %v150
    %v224 = vpop.f32.mrb[0].mxu0
    %v225 = vadd.f32 %v156, %v224
    %v226 = vpop.f32.mrb[0].mxu0
    %227 = vdwg.mxu0
    %228 = vst [vmem:[#allocation5] sm:$0xff] %v225
    // Predicated region
    $region26: #{tpu_custom_call.1} parent=1 // pred_check
      _
    $region27: #{tpu_custom_call.1} parent=1 // pred_check_branch
      %230 = sbr.rel (0) target = $region29
    $region28: #{tpu_custom_call.1} parent=1 // pred_region
      %s232 = ssub.s32 128, 128
      %233 = vsyncadd [#allocation4], %s232
      %s235 = sshll.u32 [#allocation5], 4
      %s236 = int_to_ptr.vmem [resolvable:$true] %s235
      %238 = dma.vmem_to_hbm [thread:$0]  %s236, 128, %s5, [#allocation4]
    $region29: #{tpu_custom_call.1} parent=1 // pred_fallthru
      _
    // Predicated region
    $region30: #{tpu_custom_call.1} parent=1 // pred_check
      _
    $region31: #{tpu_custom_call.1} parent=1 // pred_check_branch
      %240 = sbr.rel (0) target = $region33
    $region32: #{tpu_custom_call.1} parent=1 // pred_region
      %241 = dma.done [#allocation4], 128
    $region33: #{tpu_custom_call.1} parent=1 // pred_fallthru
      _
    %242 = vsyncpa [#allocation3], 1
    %243 = vsyncpa [#allocation4], 1

</llo_original>
